<compile_context>
chip_gen: v7x
topology: tpu7x:2x2x1
jax: 0.10.0
libtpu: 0.0.40
codegen_flags: <defaults>
</compile_context>

<pallas_src>
import jax
import jax.numpy as jnp
from jax.experimental import pallas as pl
from jax.experimental.pallas import tpu as pltpu


def _make_mlp_kernel(chunk, n_chunks):
    """Fused 3-layer MLP tile: out = relu(relu(x@w1+b1)@w2+b2)@w3 + b3.

    The row tile is split into `n_chunks` static sub-tiles of `chunk` packed
    rows (static Python loop -> aligned constant-offset slices) so the small
    layer intermediates live in vregs instead of VMEM.
    """

    def kernel(x_ref, w1_ref, b1_ref, w2_ref, b2_ref, w3_ref, b3_ref, o_ref):
        w1 = w1_ref[...]
        w2 = w2_ref[...]
        w3 = w3_ref[...]
        b1 = b1_ref[...]
        b2 = b2_ref[...]
        b3 = b3_ref[...]
        for c in range(n_chunks):
            r0 = c * chunk
            x = x_ref[pl.ds(r0, chunk), :].astype(w1.dtype)
            h = jnp.dot(x, w1, preferred_element_type=jnp.float32) + b1
            h = jnp.maximum(h, 0.0).astype(w2.dtype)
            h = jnp.dot(h, w2, preferred_element_type=jnp.float32) + b2
            h = jnp.maximum(h, 0.0).astype(w3.dtype)
            h = jnp.dot(h, w3, preferred_element_type=jnp.float32) + b3
            o_ref[pl.ds(r0, chunk), :] = h.astype(o_ref.dtype)

    return kernel


def pack_position_encoder_params(params, *, compute_dtype=jnp.bfloat16):
    """Expand weights to block-diagonal kron(I_pack, W) ONCE (call at init time).

    `pack = 128 // slot_dim` consecutive rows are folded into one lane-dense
    row so the kernel's output block is a full 128-lane slab. Weights are cast
    to `compute_dtype` (bf16 MXU operands); biases stay f32 and are added after
    the f32-accumulated dot.
    """
    w1, b1, w2, b2, w3, b3 = params
    slot_dim = w3.shape[1]
    pack = 1
    if 0 < slot_dim < 128 and 128 % slot_dim == 0:
        pack = 128 // slot_dim  # never more than needed for a lane-dense output

    def blkdiag(w):
        if pack > 1:
            w = jnp.kron(jnp.eye(pack, dtype=w.dtype), w)
        return w.astype(compute_dtype)

    def tile_b(b):
        b = b.reshape(1, -1).astype(jnp.float32)
        return jnp.tile(b, (1, pack)) if pack > 1 else b

    packed = (blkdiag(w1), tile_b(b1), blkdiag(w2), tile_b(b2),
              blkdiag(w3), tile_b(b3))
    return pack, packed


def position_encoder(x, params=None, *, packed=None, tile_rows=1024,
                     out_dtype=None, compute_dtype=jnp.bfloat16):
    """Applies the PositionEncoder MLP to x[..., pos_num] -> [..., slot_dim].

    `packed` (from pack_position_encoder_params) can be passed to skip the
    per-call packing. `tile_rows` = packed rows per grid step.
    """
    if packed is None:
        packed = pack_position_encoder_params(params, compute_dtype=compute_dtype)
    pack, (pw1, pb1, pw2, pb2, pw3, pb3) = packed

    pos_num = pw1.shape[0] // pack
    slot_dim = pw3.shape[1] // pack
    out_dtype = x.dtype if out_dtype is None else out_dtype

    lead_shape = x.shape[:-1]
    m = 1
    for d in lead_shape:
        m *= d
    x_flat = x.reshape(m, pos_num)

    # Lane-dense fold: `pack` consecutive rows -> one row. Pad the row count to
    # a multiple of `pack` (zero rows, sliced off after) instead of dropping to
    # a masked 32-lane output.
    m_pad = -(-m // pack) * pack
    if m_pad != m:
        x_flat = jnp.pad(x_flat, ((0, m_pad - m), (0, 0)))
    r = m_pad // pack
    d_in = pos_num * pack
    d_out = slot_dim * pack
    x_p = x_flat.reshape(r, d_in)

    # Row-tile selection: big tiles amortize the ~0.35us/step overhead, but keep
    # >=2 grid steps when possible so v7x's two TensorCores both get work. The
    # ragged last block is masked by Pallas (rows are independent, no padding).
    tile_rows = max(8, (tile_rows // 8) * 8)
    if r <= 8:
        tile_r = r                              # single full-extent block
    else:
        half = (((r + 1) // 2) + 7) // 8 * 8    # round8(ceil(r/2))
        tile_r = min(tile_rows, half)
    grid = (pl.cdiv(r, tile_r),)

    # In-kernel sub-tiles: largest of {256,...,8} dividing tile_r (bounded
    # unroll); otherwise process the whole tile in one pass.
    chunk = tile_r
    for c in (256, 128, 64, 32, 16, 8):
        if tile_r % c == 0:
            chunk = c
            break
    if tile_r // chunk > 8:
        chunk = tile_r
    n_chunks = tile_r // chunk

    kernel = _make_mlp_kernel(chunk, n_chunks)

    out_p = pl.pallas_call(
        kernel,
        out_shape=jax.ShapeDtypeStruct((r, d_out), out_dtype),
        grid=grid,
        in_specs=[
            pl.BlockSpec((tile_r, d_in), lambda i: (i, 0)),   # x tile
            pl.BlockSpec(pw1.shape, lambda i: (0, 0)),        # weights/biases:
            pl.BlockSpec(pb1.shape, lambda i: (0, 0)),        # constant index map
            pl.BlockSpec(pw2.shape, lambda i: (0, 0)),        # -> VMEM-resident
            pl.BlockSpec(pb2.shape, lambda i: (0, 0)),
            pl.BlockSpec(pw3.shape, lambda i: (0, 0)),
            pl.BlockSpec(pb3.shape, lambda i: (0, 0)),
        ],
        out_specs=pl.BlockSpec((tile_r, d_out), lambda i: (i, 0)),
        compiler_params=pltpu.CompilerParams(
            dimension_semantics=("parallel",),        # megacore shards row tiles
            vmem_limit_bytes=32 * 1024 * 1024,        # safe on v5e/v6e/v7x
        ),
    )(x_p, pw1, pb1, pw2, pb2, pw3, pb3)

    out = out_p.reshape(m_pad, slot_dim)
    if m_pad != m:
        out = out[:m]
    return out.reshape(*lead_shape, slot_dim)


def init_params(key, pos_num, slot_dim, dtype=jnp.float32):
    """Deterministic init matching the module's layer shapes.

    Layers: Linear(pos_num, slot_dim//4) -> Linear(slot_dim//4, slot_dim//2)
            -> Linear(slot_dim//2, slot_dim). Weights stored [in, out].
    """
    d1, d2, d3 = slot_dim // 4, slot_dim // 2, slot_dim
    k = jax.random.split(key, 6)
    w1 = jax.random.normal(k[0], (pos_num, d1), dtype) * 0.5
    b1 = jax.random.normal(k[1], (1, d1), dtype) * 0.1
    w2 = jax.random.normal(k[2], (d1, d2), dtype) * 0.5
    b2 = jax.random.normal(k[3], (1, d2), dtype) * 0.1
    w3 = jax.random.normal(k[4], (d2, d3), dtype) * 0.5
    b3 = jax.random.normal(k[5], (1, d3), dtype) * 0.1
    return (w1, b1, w2, b2, w3, b3)


def position_encoder_ref(x, params, compute_dtype=None):
    """Pure-JAX reference; compute_dtype mirrors the kernel's MXU-operand cast."""
    w1, b1, w2, b2, w3, b3 = params

    def cast(a):
        return a.astype(compute_dtype) if compute_dtype is not None else a

    h = jnp.dot(cast(x), cast(w1), preferred_element_type=jnp.float32) + b1
    h = jnp.maximum(h, 0.0)
    h = jnp.dot(cast(h), cast(w2), preferred_element_type=jnp.float32) + b2
    h = jnp.maximum(h, 0.0)
    h = jnp.dot(cast(h), cast(w3), preferred_element_type=jnp.float32) + b3
    return h


if __name__ == "__main__":
    # cfg.MODEL.SLOT.DIM = 32, cfg.WEAK_SUP.TYPE = 'bbox' -> pos_num = 4
    slot_dim = 32
    pos_num = 4
    batch, seq = 2, 8

    key = jax.random.PRNGKey(0)
    kx, kp, kx2, kx3 = jax.random.split(key, 4)
    params = init_params(kp, pos_num, slot_dim)

    # Pack once (bf16 MXU operands) and reuse across forwards.
    packed_bf16 = pack_position_encoder_params(params)

    # --- Test 1: small input, bf16 compute path + f32-compute exactness anchor.
    x = jax.random.normal(kx, (batch, seq, pos_num), jnp.float32)
    out = jax.block_until_ready(position_encoder(x, packed=packed_bf16))
    ref_bf16 = position_encoder_ref(x, params, compute_dtype=jnp.bfloat16)
    ref_f32 = position_encoder_ref(x, params)
    assert out.shape == (batch, seq, slot_dim), out.shape
    assert jnp.allclose(out, ref_bf16, atol=2e-2, rtol=2e-2), float(
        jnp.max(jnp.abs(out - ref_bf16)))
    assert jnp.allclose(out, ref_f32, atol=0.5, rtol=0.1), float(
        jnp.max(jnp.abs(out - ref_f32)))

    out_f32c = jax.block_until_ready(
        position_encoder(x, params, compute_dtype=jnp.float32))
    assert jnp.allclose(out_f32c, ref_f32, atol=1e-4, rtol=1e-4), float(
        jnp.max(jnp.abs(out_f32c - ref_f32)))

    # --- Test 2: multi-tile grid with a ragged last block (no input padding).
    x2 = jax.random.normal(kx2, (4, 1000, pos_num), jnp.float32)
    out2 = jax.block_until_ready(
        position_encoder(x2, packed=packed_bf16, tile_rows=256))
    ref2 = position_encoder_ref(x2, params, compute_dtype=jnp.bfloat16)
    assert out2.shape == (4, 1000, slot_dim), out2.shape
    assert jnp.allclose(out2, ref2, atol=2e-2, rtol=2e-2), float(
        jnp.max(jnp.abs(out2 - ref2)))

    # --- Test 3: row count not a multiple of pack -> zero-pad path.
    x3 = jax.random.normal(kx3, (3, 7, pos_num), jnp.float32)
    out3 = jax.block_until_ready(position_encoder(x3, packed=packed_bf16))
    ref3 = position_encoder_ref(x3, params, compute_dtype=jnp.bfloat16)
    assert out3.shape == (3, 7, slot_dim), out3.shape
    assert jnp.allclose(out3, ref3, atol=2e-2, rtol=2e-2), float(
        jnp.max(jnp.abs(out3 - ref3)))

    print("KERNEL_OK")
</pallas_src>

<mosaic_0001>
module attributes {stable_mosaic.version = 11 : i64} {
  func.func @kernel(%arg0: i32, %arg1: memref<4x16xf32, #tpu.memory_space<vmem>>, %arg2: memref<16x32xbf16, #tpu.memory_space<vmem>>, %arg3: memref<1x32xf32, #tpu.memory_space<vmem>>, %arg4: memref<32x64xbf16, #tpu.memory_space<vmem>>, %arg5: memref<1x64xf32, #tpu.memory_space<vmem>>, %arg6: memref<64x128xbf16, #tpu.memory_space<vmem>>, %arg7: memref<1x128xf32, #tpu.memory_space<vmem>>, %arg8: memref<4x128xf32, #tpu.memory_space<vmem>>) attributes {dimension_semantics = [#tpu.dimension_semantics<parallel>], iteration_bounds = array<i64: 1>, scalar_prefetch = 0 : i64, scratch_operands = 0 : i64, tpu.core_type = #tpu.core_type<tc>, window_params = [{transform_indices = @transform_0, window_bounds = array<i64: 4, 16>}, {pipeline_mode = #tpu.pipeline_mode<synchronous>, transform_indices = @transform_1, window_bounds = array<i64: 16, 32>}, {pipeline_mode = #tpu.pipeline_mode<synchronous>, transform_indices = @transform_2, window_bounds = array<i64: 1, 32>}, {pipeline_mode = #tpu.pipeline_mode<synchronous>, transform_indices = @transform_3, window_bounds = array<i64: 32, 64>}, {pipeline_mode = #tpu.pipeline_mode<synchronous>, transform_indices = @transform_4, window_bounds = array<i64: 1, 64>}, {pipeline_mode = #tpu.pipeline_mode<synchronous>, transform_indices = @transform_5, window_bounds = array<i64: 64, 128>}, {pipeline_mode = #tpu.pipeline_mode<synchronous>, transform_indices = @transform_6, window_bounds = array<i64: 1, 128>}, {transform_indices = @transform_7, window_bounds = array<i64: 4, 128>}]} {
    %c0 = arith.constant 0 : index
    %c0_0 = arith.constant 0 : index
    %0 = vector.load %arg2[%c0, %c0_0] : memref<16x32xbf16, #tpu.memory_space<vmem>>, vector<16x32xbf16>
    %c0_1 = arith.constant 0 : index
    %c0_2 = arith.constant 0 : index
    %1 = vector.load %arg4[%c0_1, %c0_2] : memref<32x64xbf16, #tpu.memory_space<vmem>>, vector<32x64xbf16>
    %c0_3 = arith.constant 0 : index
    %c0_4 = arith.constant 0 : index
    %2 = vector.load %arg6[%c0_3, %c0_4] : memref<64x128xbf16, #tpu.memory_space<vmem>>, vector<64x128xbf16>
    %c0_5 = arith.constant 0 : index
    %c0_6 = arith.constant 0 : index
    %3 = vector.load %arg3[%c0_5, %c0_6] : memref<1x32xf32, #tpu.memory_space<vmem>>, vector<1x32xf32>
    %c0_7 = arith.constant 0 : index
    %c0_8 = arith.constant 0 : index
    %4 = vector.load %arg5[%c0_7, %c0_8] : memref<1x64xf32, #tpu.memory_space<vmem>>, vector<1x64xf32>
    %c0_9 = arith.constant 0 : index
    %c0_10 = arith.constant 0 : index
    %5 = vector.load %arg7[%c0_9, %c0_10] : memref<1x128xf32, #tpu.memory_space<vmem>>, vector<1x128xf32>
    %c0_11 = arith.constant 0 : index
    %c0_12 = arith.constant 0 : index
    %6 = vector.load %arg1[%c0_11, %c0_12] : memref<4x16xf32, #tpu.memory_space<vmem>>, vector<4x16xf32>
    %7 = arith.truncf %6 : vector<4x16xf32> to vector<4x16xbf16>
    %cst = arith.constant dense<0.000000e+00> : vector<4x32xf32>
    %8 = tpu.matmul %7, %0, %cst {dimension_numbers = #tpu.dot_dimension_numbers<[1], [0], [0], [1], [0, 0, 1, 1], [], []>} : vector<4x16xbf16>, vector<16x32xbf16>, vector<4x32xf32> -> vector<4x32xf32>
    %9 = vector.broadcast %3 : vector<1x32xf32> to vector<4x32xf32>
    %10 = arith.addf %8, %9 : vector<4x32xf32>
    %cst_13 = arith.constant 0.000000e+00 : f32
    %11 = vector.broadcast %cst_13 : f32 to vector<4x32xf32>
    %12 = arith.maximumf %10, %11 : vector<4x32xf32>
    %13 = arith.truncf %12 : vector<4x32xf32> to vector<4x32xbf16>
    %cst_14 = arith.constant dense<0.000000e+00> : vector<4x64xf32>
    %14 = tpu.matmul %13, %1, %cst_14 {dimension_numbers = #tpu.dot_dimension_numbers<[1], [0], [0], [1], [0, 0, 1, 1], [], []>} : vector<4x32xbf16>, vector<32x64xbf16>, vector<4x64xf32> -> vector<4x64xf32>
    %15 = vector.broadcast %4 : vector<1x64xf32> to vector<4x64xf32>
    %16 = arith.addf %14, %15 : vector<4x64xf32>
    %cst_15 = arith.constant 0.000000e+00 : f32
    %17 = vector.broadcast %cst_15 : f32 to vector<4x64xf32>
    %18 = arith.maximumf %16, %17 : vector<4x64xf32>
    %19 = arith.truncf %18 : vector<4x64xf32> to vector<4x64xbf16>
    %cst_16 = arith.constant dense<0.000000e+00> : vector<4x128xf32>
    %20 = tpu.matmul %19, %2, %cst_16 {dimension_numbers = #tpu.dot_dimension_numbers<[1], [0], [0], [1], [0, 0, 1, 1], [], []>} : vector<4x64xbf16>, vector<64x128xbf16>, vector<4x128xf32> -> vector<4x128xf32>
    %21 = vector.broadcast %5 : vector<1x128xf32> to vector<4x128xf32>
    %22 = arith.addf %20, %21 : vector<4x128xf32>
    %c0_17 = arith.constant 0 : index
    %c0_18 = arith.constant 0 : index
    %23 = vector.load %arg8[%c0_17, %c0_18] : memref<4x128xf32, #tpu.memory_space<vmem>>, vector<4x128xf32>
    tpu.vector_store %arg8[%c0_17, %c0_18], %22 {strides = array<i32>} : memref<4x128xf32, #tpu.memory_space<vmem>>, vector<4x128xf32>,
    return
  }
  func.func @transform_0(%arg0: i32) -> (i32, i32) {
    %c0_i32 = arith.constant 0 : i32
    %c0_i32_0 = arith.constant 0 : i32
    return %arg0, %c0_i32 : i32, i32
  }
  func.func @transform_1(%arg0: i32) -> (i32, i32) {
    %c0_i32 = arith.constant 0 : i32
    %c0_i32_0 = arith.constant 0 : i32
    %c0_i32_1 = arith.constant 0 : i32
    return %c0_i32, %c0_i32_0 : i32, i32
  }
  func.func @transform_2(%arg0: i32) -> (i32, i32) {
    %c0_i32 = arith.constant 0 : i32
    %c0_i32_0 = arith.constant 0 : i32
    %c0_i32_1 = arith.constant 0 : i32
    return %c0_i32, %c0_i32_0 : i32, i32
  }
  func.func @transform_3(%arg0: i32) -> (i32, i32) {
    %c0_i32 = arith.constant 0 : i32
    %c0_i32_0 = arith.constant 0 : i32
    %c0_i32_1 = arith.constant 0 : i32
    return %c0_i32, %c0_i32_0 : i32, i32
  }
  func.func @transform_4(%arg0: i32) -> (i32, i32) {
    %c0_i32 = arith.constant 0 : i32
    %c0_i32_0 = arith.constant 0 : i32
    %c0_i32_1 = arith.constant 0 : i32
    return %c0_i32, %c0_i32_0 : i32, i32
  }
  func.func @transform_5(%arg0: i32) -> (i32, i32) {
    %c0_i32 = arith.constant 0 : i32
    %c0_i32_0 = arith.constant 0 : i32
    %c0_i32_1 = arith.constant 0 : i32
    return %c0_i32, %c0_i32_0 : i32, i32
  }
  func.func @transform_6(%arg0: i32) -> (i32, i32) {
    %c0_i32 = arith.constant 0 : i32
    %c0_i32_0 = arith.constant 0 : i32
    %c0_i32_1 = arith.constant 0 : i32
    return %c0_i32, %c0_i32_0 : i32, i32
  }
  func.func @transform_7(%arg0: i32) -> (i32, i32) {
    %c0_i32 = arith.constant 0 : i32
    %c0_i32_0 = arith.constant 0 : i32
    return %arg0, %c0_i32 : i32, i32
  }
}

</mosaic_0001>

<llo_original>
// kernel: tpu_custom_call.1
$region0: #{tpu_custom_call.1}
  #allocation0 [shape = 'u32[]', space=smem, size = 0x4, offset = 0x4, fixed_abs, tag = 'smem constant byte address 0x4 - core index']
  #allocation1 [shape = 'u32[144,128]{1,0:T(1,128)}', space=vmem, size = 0x12000, scoped, tag = 'internal scratch']
  %s0 = inlined_call_operand.hbm [shape: f32[4,16], index: 0, kind: input, shape index: {}]
  %s1 = inlined_call_operand.hbm [shape: bf16[16,32], index: 1, kind: input, shape index: {}]
  %s2 = inlined_call_operand.vmem [shape: f32[1,32], index: 2, kind: input, shape index: {}]
  %s3 = inlined_call_operand.hbm [shape: bf16[32,64], index: 3, kind: input, shape index: {}]
  %s4 = inlined_call_operand.vmem [shape: f32[1,64], index: 4, kind: input, shape index: {}]
  %s5 = inlined_call_operand.hbm [shape: bf16[64,128], index: 5, kind: input, shape index: {}]
  %s6 = inlined_call_operand.vmem [shape: f32[1,128], index: 6, kind: input, shape index: {}]
  %s7 = inlined_call_operand.hbm [shape: f32[4,128], index: 7, kind: output, shape index: {}]
  %s8 = sld [smem:[#allocation0]]
  $region54: #{tpu_custom_call.1} parent=0
    _
  %s10 = ssub.s32 1, %s8
  %s11 = scalar_select 0, %s10, %s8
  $region1: #{tpu_custom_call.1} parent=0
    #allocation2 [shape = 'u8[2048]{0}', space=vmem, size = 0x800, scoped, tag = 'input window, operand 0, single buffered']
    #allocation3 [shape = 's32[1]{0}', space=sflag, size = 0x4, scoped, tag = 'scoped memory for tpu_custom_call.1']
    #allocation4 [shape = 's32[1]{0}', space=sflag, size = 0x4, scoped, tag = 'scoped memory for tpu_custom_call.1']
    #allocation5 [shape = 'u8[4096]{0}', space=vmem, size = 0x1000, scoped, tag = 'input window, operand 1, single buffered']
    #allocation6 [shape = 's32[1]{0}', space=sflag, size = 0x4, scoped, tag = 'scoped memory for tpu_custom_call.1']
    #allocation7 [shape = 'u8[8192]{0}', space=vmem, size = 0x2000, scoped, tag = 'input window, operand 3, single buffered']
    #allocation8 [shape = 'u8[16384]{0}', space=vmem, size = 0x4000, scoped, tag = 'input window, operand 5, single buffered']
    #allocation9 [shape = 's32[1]{0}', space=sflag, size = 0x4, scoped, tag = 'scoped memory for tpu_custom_call.1']
    #allocation10 [shape = 'u8[2048]{0}', space=vmem, size = 0x800, scoped, tag = 'output window, operand 0, single buffered']
    %12 = vsyncpa [#allocation3], 0
    %13 = vsyncpa [#allocation6], 0
    %14 = vsyncpa [#allocation9], 0
    %15 = vsyncpa [#allocation4], 0
    // Predicated region
    $region2: #{tpu_custom_call.1} parent=1 // pred_check
      _
    $region3: #{tpu_custom_call.1} parent=1 // pred_check_branch
      %17 = sbr.rel (0) target = $region5
    $region4: #{tpu_custom_call.1} parent=1 // pred_region
      %s19 = ssub.s32 64, 64
      %20 = vsyncadd [#allocation3], %s19
      %s22 = sshll.u32 [#allocation2], 4
      %s23 = int_to_ptr.vmem [resolvable:$true] %s22
      %25 = dma.hbm_to_vmem [thread:$0]  %s0, 64, %s23, [#allocation3]
    $region5: #{tpu_custom_call.1} parent=1 // pred_fallthru
      _
    // Predicated region
    $region6: #{tpu_custom_call.1} parent=1 // pred_check
      _
    $region7: #{tpu_custom_call.1} parent=1 // pred_check_branch
      %27 = sbr.rel (0) target = $region9
    $region8: #{tpu_custom_call.1} parent=1 // pred_region
      %s29 = ssub.s32 128, 128
      %30 = vsyncadd [#allocation6], %s29
      %s31 = sshll.u32 [#allocation5], 4
      %s32 = int_to_ptr.vmem [resolvable:$true] %s31
      %37 = dma.hbm_to_vmem [thread:$0]  %s1, 128, %s32, [#allocation6], 64, 64, 4
    $region9: #{tpu_custom_call.1} parent=1 // pred_fallthru
      _
    // Predicated region
    $region10: #{tpu_custom_call.1} parent=1 // pred_check
      _
    $region11: #{tpu_custom_call.1} parent=1 // pred_check_branch
      %39 = sbr.rel (0) target = $region13
    $region12: #{tpu_custom_call.1} parent=1 // pred_region
      _
    $region13: #{tpu_custom_call.1} parent=1 // pred_fallthru
      _
    // Predicated region
    $region14: #{tpu_custom_call.1} parent=1 // pred_check
      _
    $region15: #{tpu_custom_call.1} parent=1 // pred_check_branch
      %41 = sbr.rel (0) target = $region17
    $region16: #{tpu_custom_call.1} parent=1 // pred_region
      %s43 = ssub.s32 256, 256
      %44 = vsyncadd [#allocation6], %s43
      %s45 = sshll.u32 [#allocation7], 4
      %s46 = int_to_ptr.vmem [resolvable:$true] %s45
      %51 = dma.hbm_to_vmem [thread:$0]  %s3, 256, %s46, [#allocation6], 64, 64, 4
    $region17: #{tpu_custom_call.1} parent=1 // pred_fallthru
      _
    // Predicated region
    $region18: #{tpu_custom_call.1} parent=1 // pred_check
      _
    $region19: #{tpu_custom_call.1} parent=1 // pred_check_branch
      %53 = sbr.rel (0) target = $region21
    $region20: #{tpu_custom_call.1} parent=1 // pred_region
      _
    $region21: #{tpu_custom_call.1} parent=1 // pred_fallthru
      _
    // Predicated region
    $region22: #{tpu_custom_call.1} parent=1 // pred_check
      _
    $region23: #{tpu_custom_call.1} parent=1 // pred_check_branch
      %55 = sbr.rel (0) target = $region25
    $region24: #{tpu_custom_call.1} parent=1 // pred_region
      %s57 = ssub.s32 512, 512
      %58 = vsyncadd [#allocation9], %s57
      %s59 = sshll.u32 [#allocation8], 4
      %s60 = int_to_ptr.vmem [resolvable:$true] %s59
      %65 = dma.hbm_to_vmem [thread:$0]  %s5, 512, %s60, [#allocation9], 64, 64, 4
    $region25: #{tpu_custom_call.1} parent=1 // pred_fallthru
      _
    // Predicated region
    $region26: #{tpu_custom_call.1} parent=1 // pred_check
      _
    $region27: #{tpu_custom_call.1} parent=1 // pred_check_branch
      %67 = sbr.rel (0) target = $region29
    $region28: #{tpu_custom_call.1} parent=1 // pred_region
      _
    $region29: #{tpu_custom_call.1} parent=1 // pred_fallthru
      _
    // Predicated region
    $region30: #{tpu_custom_call.1} parent=1 // pred_check
      _
    $region31: #{tpu_custom_call.1} parent=1 // pred_check_branch
      %69 = sbr.rel (0) target = $region33
    $region32: #{tpu_custom_call.1} parent=1 // pred_region
      %70 = dma.done [#allocation3], 64
    $region33: #{tpu_custom_call.1} parent=1 // pred_fallthru
      _
    // Predicated region
    $region34: #{tpu_custom_call.1} parent=1 // pred_check
      _
    $region35: #{tpu_custom_call.1} parent=1 // pred_check_branch
      %72 = sbr.rel (0) target = $region37
    $region36: #{tpu_custom_call.1} parent=1 // pred_region
      %73 = dma.done [#allocation6], 128
    $region37: #{tpu_custom_call.1} parent=1 // pred_fallthru
      _
    // Predicated region
    $region38: #{tpu_custom_call.1} parent=1 // pred_check
      _
    $region39: #{tpu_custom_call.1} parent=1 // pred_check_branch
      %75 = sbr.rel (0) target = $region41
    $region40: #{tpu_custom_call.1} parent=1 // pred_region
      %76 = dma.done [#allocation6], 256
    $region41: #{tpu_custom_call.1} parent=1 // pred_fallthru
      _
    // Predicated region
    $region42: #{tpu_custom_call.1} parent=1 // pred_check
      _
    $region43: #{tpu_custom_call.1} parent=1 // pred_check_branch
      %78 = sbr.rel (0) target = $region45
    $region44: #{tpu_custom_call.1} parent=1 // pred_region
      %79 = dma.done [#allocation9], 512
    $region45: #{tpu_custom_call.1} parent=1 // pred_fallthru
      _
    %v81 = vld [vmem:[#allocation5] sm:$0xf]
    %v82 = vld [vmem:[#allocation5 + $0x4] sm:$0xf]
    %v83 = vld [vmem:[#allocation7] sm:$0xf]
    %v84 = vld [vmem:[#allocation7 + $0x4] sm:$0xf]
    %v85 = vld [vmem:[#allocation7 + $0x8] sm:$0xf]
    %v86 = vld [vmem:[#allocation7 + $0xc] sm:$0xf]
    %v87 = vld [vmem:[#allocation8] sm:$0xf]
    %v88 = vld [vmem:[#allocation8 + $0x4] sm:$0xf]
    %v89 = vld [vmem:[#allocation8 + $0x8] sm:$0xf]
    %v90 = vld [vmem:[#allocation8 + $0xc] sm:$0xf]
    %v91 = vld [vmem:[#allocation8 + $0x10] sm:$0xf]
    %v92 = vld [vmem:[#allocation8 + $0x14] sm:$0xf]
    %v93 = vld [vmem:[#allocation8 + $0x18] sm:$0xf]
    %v94 = vld [vmem:[#allocation8 + $0x1c] sm:$0xf]
    %v95 = vld [vmem:[%s2] sm:$0x1]
    %v96 = vld [vmem:[%s4] sm:$0x1]
    %v97 = vld [vmem:[%s6] sm:$0x1]
    %v98 = vld [vmem:[#allocation2] sm:$0xf]
    %v99 = vpack.c.bf16 %v98, %v98
    %v101 = vlaneseq
    %v102 = vshrl.u32 %v101, 7
    %v103 = vsub.s32 0, %v102
    %v104 = vrot.slane %v95, %v103
    %v108 = vunpack.c.l.b16 %v81
    %v109 = vunpack.c.l.b16 %v82
    %v110 = vpack.c.b16 %v109, %v108
    %vm112 = vcmask 130048
    %v114 = vsel %vm112, %v99, 0
    %116 = vmatprep.subr.bf16.mxu0 0
    %117 = vmatpush1.bf16.msra.mxu0 %v110
    %118 = vmatprep.subr.bf16.mxu0 0
    %119 = vmatpush1.bf16.msra.mxu0 0
    %120 = vmatprep.subr.bf16.mxu0 0
    %121 = vmatpush1.bf16.msra.mxu0 0
    %122 = vmatprep.subr.bf16.mxu0 0
    %123 = vmatpush1.bf16.msra.mxu0 0
    %124 = vmatprep.subr.bf16.mxu0 0
    %125 = vmatpush1.bf16.msra.mxu0 0
    %126 = vmatprep.subr.bf16.mxu0 0
    %127 = vmatpush1.bf16.msra.mxu0 0
    %128 = vmatprep.subr.bf16.mxu0 0
    %129 = vmatpush1.bf16.msra.mxu0 0
    %130 = vmatprep.subr.bf16.mxu0 0
    %131 = vmatpush1.bf16.msra.mxu0 0
    %132 = vmatprep.subr.bf16.mxu0 0
    %133 = vmatpush1.bf16.msra.mxu0 0
    %134 = vmatprep.subr.bf16.mxu0 0
    %135 = vmatpush1.bf16.msra.mxu0 0
    %136 = vmatprep.subr.bf16.mxu0 0
    %137 = vmatpush1.bf16.msra.mxu0 0
    %138 = vmatprep.subr.bf16.mxu0 0
    %139 = vmatpush1.bf16.msra.mxu0 0
    %140 = vmatprep.subr.bf16.mxu0 0
    %141 = vmatpush1.bf16.msra.mxu0 0
    %142 = vmatprep.subr.bf16.mxu0 0
    %143 = vmatpush1.bf16.msra.mxu0 0
    %144 = vmatprep.subr.bf16.mxu0 0
    %145 = vmatpush1.bf16.msra.mxu0 0
    %146 = vmatprep.subr.bf16.mxu0 0
    %147 = vmatpush1.bf16.msra.mxu0 0
    %148 = vmatprep.mubr.bf16.mxu0 0
    %149 = vmatmul.mubr.bf16.gmra.mrb[0].mxu0 %v114
    %v150 = vpop.f32.mrb[0].mxu0
    %v151 = vadd.f32 %v104, %v150
    %v152 = vpop.f32.mrb[0].mxu0
    %v153 = vpop.f32.mrb[0].mxu0
    %v154 = vpop.f32.mrb[0].mxu0
    %155 = vdwg.mxu0
    %v156 = vmax.f32 %v151, 0.0
    %v157 = vpack.c.bf16 %v156, %v156
    %v159 = vlaneseq
    %v160 = vshrl.u32 %v159, 7
    %v161 = vsub.s32 0, %v160
    %v162 = vrot.slane %v96, %v161
    %v168 = vunpack.c.l.b16 %v83
    %v169 = vunpack.c.l.b16 %v84
    %v170 = vunpack.c.l.b16 %v85
    %v171 = vunpack.c.l.b16 %v86
    %v172 = vpack.c.b16 %v169, %v168
    %v173 = vpack.c.b16 %v171, %v170
    %vm176 = vcmask 261120
    %v178 = vsel %vm176, %v157, 0
    %180 = vmatprep.subr.bf16.mxu0 0
    %181 = vmatpush1.bf16.msra.mxu0 %v172
    %182 = vmatprep.subr.bf16.mxu0 0
    %183 = vmatpush1.bf16.msra.mxu0 %v173
    %184 = vmatprep.subr.bf16.mxu0 0
    %185 = vmatpush1.bf16.msra.mxu0 0
    %186 = vmatprep.subr.bf16.mxu0 0
    %187 = vmatpush1.bf16.msra.mxu0 0
    %188 = vmatprep.subr.bf16.mxu0 0
    %189 = vmatpush1.bf16.msra.mxu0 0
    %190 = vmatprep.subr.bf16.mxu0 0
    %191 = vmatpush1.bf16.msra.mxu0 0
    %192 = vmatprep.subr.bf16.mxu0 0
    %193 = vmatpush1.bf16.msra.mxu0 0
    %194 = vmatprep.subr.bf16.mxu0 0
    %195 = vmatpush1.bf16.msra.mxu0 0
    %196 = vmatprep.subr.bf16.mxu0 0
    %197 = vmatpush1.bf16.msra.mxu0 0
    %198 = vmatprep.subr.bf16.mxu0 0
    %199 = vmatpush1.bf16.msra.mxu0 0
    %200 = vmatprep.subr.bf16.mxu0 0
    %201 = vmatpush1.bf16.msra.mxu0 0
    %202 = vmatprep.subr.bf16.mxu0 0
    %203 = vmatpush1.bf16.msra.mxu0 0
    %204 = vmatprep.subr.bf16.mxu0 0
    %205 = vmatpush1.bf16.msra.mxu0 0
    %206 = vmatprep.subr.bf16.mxu0 0
    %207 = vmatpush1.bf16.msra.mxu0 0
    %208 = vmatprep.subr.bf16.mxu0 0
    %209 = vmatpush1.bf16.msra.mxu0 0
    %210 = vmatprep.subr.bf16.mxu0 0
    %211 = vmatpush1.bf16.msra.mxu0 0
    %212 = vmatprep.mubr.bf16.mxu0 0
    %213 = vmatmul.mubr.bf16.gmra.mrb[0].mxu0 %v178
    %v214 = vpop.f32.mrb[0].mxu0
    %v215 = vadd.f32 %v162, %v214
    %v216 = vpop.f32.mrb[0].mxu0
    %v217 = vpop.f32.mrb[0].mxu0
    %v218 = vpop.f32.mrb[0].mxu0
    %219 = vdwg.mxu0
    %v220 = vmax.f32 %v215, 0.0
    %v221 = vpack.c.bf16 %v220, %v220
    %v223 = vlaneseq
    %v224 = vshrl.u32 %v223, 7
    %v225 = vsub.s32 0, %v224
    %v226 = vrot.slane %v97, %v225
    %v236 = vunpack.c.l.b16 %v87
    %v237 = vunpack.c.l.b16 %v88
    %v238 = vunpack.c.l.b16 %v89
    %v239 = vunpack.c.l.b16 %v90
    %v240 = vunpack.c.l.b16 %v91
    %v241 = vunpack.c.l.b16 %v92
    %v242 = vunpack.c.l.b16 %v93
    %v243 = vunpack.c.l.b16 %v94
    %v244 = vpack.c.b16 %v237, %v236
    %v245 = vpack.c.b16 %v239, %v238
    %v246 = vpack.c.b16 %v241, %v240
    %v247 = vpack.c.b16 %v243, %v242
    %vm252 = vcmask 523264
    %v254 = vsel %vm252, %v221, 0
    %256 = vmatprep.subr.bf16.mxu0 0
    %257 = vmatpush1.bf16.msra.mxu0 %v244
    %258 = vmatprep.subr.bf16.mxu0 0
    %259 = vmatpush1.bf16.msra.mxu0 %v245
    %260 = vmatprep.subr.bf16.mxu0 0
    %261 = vmatpush1.bf16.msra.mxu0 %v246
    %262 = vmatprep.subr.bf16.mxu0 0
    %263 = vmatpush1.bf16.msra.mxu0 %v247
    %264 = vmatprep.subr.bf16.mxu0 0
    %265 = vmatpush1.bf16.msra.mxu0 0
    %266 = vmatprep.subr.bf16.mxu0 0
    %267 = vmatpush1.bf16.msra.mxu0 0
    %268 = vmatprep.subr.bf16.mxu0 0
    %269 = vmatpush1.bf16.msra.mxu0 0
    %270 = vmatprep.subr.bf16.mxu0 0
    %271 = vmatpush1.bf16.msra.mxu0 0
    %272 = vmatprep.subr.bf16.mxu0 0
    %273 = vmatpush1.bf16.msra.mxu0 0
    %274 = vmatprep.subr.bf16.mxu0 0
    %275 = vmatpush1.bf16.msra.mxu0 0
    %276 = vmatprep.subr.bf16.mxu0 0
    %277 = vmatpush1.bf16.msra.mxu0 0
    %278 = vmatprep.subr.bf16.mxu0 0
    %279 = vmatpush1.bf16.msra.mxu0 0
    %280 = vmatprep.subr.bf16.mxu0 0
    %281 = vmatpush1.bf16.msra.mxu0 0
    %282 = vmatprep.subr.bf16.mxu0 0
    %283 = vmatpush1.bf16.msra.mxu0 0
    %284 = vmatprep.subr.bf16.mxu0 0
    %285 = vmatpush1.bf16.msra.mxu0 0
    %286 = vmatprep.subr.bf16.mxu0 0
    %287 = vmatpush1.bf16.msra.mxu0 0
    %288 = vmatprep.mubr.bf16.mxu0 0
    %289 = vmatmul.mubr.bf16.gmra.mrb[0].mxu0 %v254
    %v290 = vpop.f32.mrb[0].mxu0
    %v291 = vadd.f32 %v226, %v290
    %v292 = vpop.f32.mrb[0].mxu0
    %v293 = vpop.f32.mrb[0].mxu0
    %v294 = vpop.f32.mrb[0].mxu0
    %295 = vdwg.mxu0
    %296 = vst [vmem:[#allocation10] sm:$0xf] %v291
    // Predicated region
    $region46: #{tpu_custom_call.1} parent=1 // pred_check
      _
    $region47: #{tpu_custom_call.1} parent=1 // pred_check_branch
      %298 = sbr.rel (0) target = $region49
    $region48: #{tpu_custom_call.1} parent=1 // pred_region
      %s300 = ssub.s32 64, 64
      %301 = vsyncadd [#allocation4], %s300
      %s303 = sshll.u32 [#allocation10], 4
      %s304 = int_to_ptr.vmem [resolvable:$true] %s303
      %306 = dma.vmem_to_hbm [thread:$0]  %s304, 64, %s7, [#allocation4]
    $region49: #{tpu_custom_call.1} parent=1 // pred_fallthru
      _
    // Predicated region
    $region50: #{tpu_custom_call.1} parent=1 // pred_check
      _
    $region51: #{tpu_custom_call.1} parent=1 // pred_check_branch
      %308 = sbr.rel (0) target = $region53
    $region52: #{tpu_custom_call.1} parent=1 // pred_region
      %309 = dma.done [#allocation4], 64
    $region53: #{tpu_custom_call.1} parent=1 // pred_fallthru
      _
    %310 = vsyncpa [#allocation3], 1
    %311 = vsyncpa [#allocation6], 1
    %312 = vsyncpa [#allocation9], 1
    %313 = vsyncpa [#allocation4], 1

</llo_original>
